<compile_context>
chip_gen: v6e
topology: v6e:2x2x1
jax: 0.10.0
libtpu: 0.0.40
codegen_flags: <defaults>
</compile_context>

<pallas_src>
import jax
import jax.numpy as jnp
from jax.experimental import pallas as pl
from jax.experimental.pallas import tpu as pltpu

_MIB = 1024 * 1024


def _tpu_vmem_capacity_bytes():
    """Physical VMEM per TensorCore; conservative (v7x) fallback if unknown."""
    try:
        return int(pltpu.get_tpu_info().vmem_capacity_bytes)
    except Exception:
        return 64 * _MIB


def _sublane_for(dtype):
    """Dtype-native sublane multiple (8 for 4B, 16 for 2B, 32 for 1B)."""
    return {1: 32, 2: 16, 4: 8}.get(jnp.dtype(dtype).itemsize, 8)


# -----------------------------------------------------------------------------
# Materialized-copy kernel: lane-dense big tiles, HBM-roofline bound.
# -----------------------------------------------------------------------------
def _identity_copy_kernel(x_ref, o_ref):
    o_ref[...] = x_ref[...]


def identity_copy(x2d, *, target_tile_bytes=None):
    """Copy a 2-D array into a fresh buffer using multi-MiB lane-dense tiles."""
    R, C = x2d.shape
    itemsize = jnp.dtype(x2d.dtype).itemsize
    sublane = _sublane_for(x2d.dtype)
    vmem_cap = _tpu_vmem_capacity_bytes()

    if target_tile_bytes is None:
        # ~8 MiB tiles on 64-MiB-VMEM parts (v7x), ~16 MiB on 128-MiB parts
        # (v5e/v6e) to amortize the ~0.35 us per-grid-step pipeline overhead.
        target_tile_bytes = 8 * _MIB if vmem_cap <= 64 * _MIB else 16 * _MIB

    # Column blocking: if even `sublane` rows of the full width exceed the tile
    # budget, block C into a multiple of 128 so the tile budget always holds.
    if C % 128 == 0 and sublane * C * itemsize > target_tile_bytes:
        tile_cols = max(128, (target_tile_bytes // (sublane * itemsize * 128)) * 128)
        tile_cols = min(tile_cols, C)
    else:
        tile_cols = C  # full-extent columns are always a legal block dim

    row_bytes = max(1, tile_cols * itemsize)
    tile_rows = max(1, target_tile_bytes // row_bytes)
    tile_rows = min(tile_rows, R)
    if tile_rows < R:
        # Sublane-aligned rows; column blocking guarantees tile_rows >= sublane
        # here whenever C is lane-dense, so this never inflates past budget.
        tile_rows = max(sublane, (tile_rows // sublane) * sublane)
        tile_rows = min(tile_rows, R)

    grid_r = -(-R // tile_rows)
    grid_c = -(-C // tile_cols)

    # On v7x-like parts (64 MiB VMEM => 2 TensorCores) make sure there are at
    # least two tiles so the "parallel" grid shards across both cores. Skip on
    # single-TC v5e/v6e where it would only add a pipeline step.
    if vmem_cap <= 64 * _MIB and grid_r * grid_c == 1 and R >= 2 * sublane:
        half = -(-((R + 1) // 2) // sublane) * sublane
        if 0 < half < R:
            tile_rows = half
            grid_r = -(-R // tile_rows)

    tile_bytes = tile_rows * tile_cols * itemsize
    # Double-buffered in + out (4x tile) + headroom, clamped to 7/8 of the
    # generation's physical VMEM (56 MiB on v7x, 112 MiB on v5e/v6e).
    vmem_limit = int(min(vmem_cap * 7 // 8,
                         max(32 * _MIB, 4 * tile_bytes + 4 * _MIB)))

    total_bytes = R * C * itemsize
    cost = pl.CostEstimate(flops=0, transcendentals=0,
                           bytes_accessed=2 * total_bytes)

    return pl.pallas_call(
        _identity_copy_kernel,
        out_shape=jax.ShapeDtypeStruct((R, C), x2d.dtype),
        grid_spec=pltpu.PrefetchScalarGridSpec(
            num_scalar_prefetch=0,
            grid=(grid_r, grid_c),
            in_specs=[pl.BlockSpec((tile_rows, tile_cols), lambda i, j: (i, j))],
            out_specs=pl.BlockSpec((tile_rows, tile_cols), lambda i, j: (i, j)),
        ),
        compiler_params=pltpu.CompilerParams(
            dimension_semantics=("parallel", "parallel"),
            vmem_limit_bytes=vmem_limit,
        ),
        cost_estimate=cost,
    )(x2d)


def _prepare_lane_dense(x):
    """Reshape to a lane-dense 2-D slab; pad ragged sizes to a multiple of 128.

    Returns (x2d, pad_elems).
    """
    if x.ndim >= 2 and x.shape[-1] % 128 == 0:
        return x.reshape(-1, x.shape[-1]), 0
    n = x.size
    for width in (4096, 2048, 1024, 512, 256, 128):
        if n % width == 0:
            return x.reshape(-1, width), 0
    # Ragged: pad to the next multiple of 128 so every tile stays lane-dense
    # (unmasked vst), then slice the pad off after the copy.
    pad = (-n) % 128
    flat = jnp.pad(x.reshape(-1), (0, pad))
    return flat.reshape(-1, 128), pad


# -----------------------------------------------------------------------------
# Module wrapper (matches IValueProcessing.forward).
# -----------------------------------------------------------------------------
def ivalue_processing_module(tokenized_data, *, materialize_copy=False):
    """IValueProcessing.forward: returns `tokenized_data` unchanged.

    Default: no kernel at all (identity is free — zero launch overhead, zero
    HBM traffic). materialize_copy=True writes a fresh buffer via the tiled
    lane-dense copy kernel.
    """
    if not materialize_copy:
        return tokenized_data
    if tokenized_data.size == 0:
        return tokenized_data
    x2d, pad = _prepare_lane_dense(tokenized_data)
    out2d = identity_copy(x2d)
    if pad:
        out = out2d.reshape(-1)[: tokenized_data.size]
    else:
        out = out2d
    return out.reshape(tokenized_data.shape)


if __name__ == "__main__":
    key = jax.random.PRNGKey(0)
    k_tok, k_feat, k_1d = jax.random.split(key, 3)

    # "Tokenized data" as integer ids: (batch=2, seq=128) int32.
    tokens = jax.random.randint(k_tok, (2, 128), 0, 32000, dtype=jnp.int32)
    # Float features: (batch=2, seq=8, hidden=32) float32.
    feats = jax.random.normal(k_feat, (2, 8, 32), dtype=jnp.float32)
    # Ragged 1-D input (exercises the pad-to-128 lane-dense fallback).
    flat1d = jax.random.randint(k_1d, (300,), 0, 1000, dtype=jnp.int32)

    y_tok = ivalue_processing_module(tokens)                          # no-kernel identity
    y_feat = ivalue_processing_module(feats, materialize_copy=True)   # tiled copy kernel
    y_1d = ivalue_processing_module(flat1d, materialize_copy=True)    # ragged 1-D handling

    jax.block_until_ready((y_tok, y_feat, y_1d))

    assert y_tok.shape == tokens.shape and y_tok.dtype == tokens.dtype
    assert y_feat.shape == feats.shape and y_feat.dtype == feats.dtype
    assert y_1d.shape == flat1d.shape and y_1d.dtype == flat1d.dtype
    assert bool(jnp.all(y_tok == tokens))
    assert bool(jnp.all(y_feat == feats))
    assert bool(jnp.all(y_1d == flat1d))
    print("KERNEL_OK")
</pallas_src>

<mosaic_0001>
module attributes {stable_mosaic.version = 11 : i64} {
  func.func @_identity_copy_kernel(%arg0: i32, %arg1: i32, %arg2: memref<1x512xf32, #tpu.memory_space<vmem>>, %arg3: memref<1x512xf32, #tpu.memory_space<vmem>>) attributes {dimension_semantics = [#tpu.dimension_semantics<parallel>, #tpu.dimension_semantics<parallel>], iteration_bounds = array<i64: 1, 1>, scalar_prefetch = 0 : i64, scratch_operands = 0 : i64, tpu.core_type = #tpu.core_type<tc>, window_params = [{transform_indices = @transform_0, window_bounds = array<i64: 1, 512>}, {transform_indices = @transform_1, window_bounds = array<i64: 1, 512>}]} {
    %c0 = arith.constant 0 : index
    %c0_0 = arith.constant 0 : index
    %0 = vector.load %arg2[%c0, %c0_0] : memref<1x512xf32, #tpu.memory_space<vmem>>, vector<1x512xf32>
    %c0_1 = arith.constant 0 : index
    %c0_2 = arith.constant 0 : index
    %1 = vector.load %arg3[%c0_1, %c0_2] : memref<1x512xf32, #tpu.memory_space<vmem>>, vector<1x512xf32>
    tpu.vector_store %arg3[%c0_1, %c0_2], %0 {strides = array<i32>} : memref<1x512xf32, #tpu.memory_space<vmem>>, vector<1x512xf32>,
    return
  }
  func.func @transform_0(%arg0: i32, %arg1: i32) -> (i32, i32) {
    %c0_i32 = arith.constant 0 : i32
    return %arg0, %arg1 : i32, i32
  }
  func.func @transform_1(%arg0: i32, %arg1: i32) -> (i32, i32) {
    %c0_i32 = arith.constant 0 : i32
    return %arg0, %arg1 : i32, i32
  }
}

</mosaic_0001>

<llo_original>
// kernel: tpu_custom_call.1
$region0: #{tpu_custom_call.1}
  #allocation0 [shape = 'u32[]', space=smem, size = 0x4, offset = 0x4, fixed_abs, tag = 'smem constant byte address 0x4 - core index']
  #allocation1 [shape = 'u32[144,128]{1,0:T(1,128)}', space=vmem, size = 0x12000, scoped, tag = 'internal scratch']
  %s0 = inlined_call_operand.hbm [shape: f32[1,512], index: 0, kind: input, shape index: {}]
  %s1 = inlined_call_operand.hbm [shape: f32[1,512], index: 1, kind: output, shape index: {}]
  %s2 = sld [smem:[#allocation0]]
  $region18: #{tpu_custom_call.1} parent=0
    _
  %s4 = ssub.s32 1, %s2
  %s5 = scalar_select 0, %s4, %s2
  $region1: #{tpu_custom_call.1} parent=0
    #allocation2 [shape = 'u8[2048]{0}', space=vmem, size = 0x800, scoped, tag = 'input window, operand 0, single buffered']
    #allocation3 [shape = 's32[1]{0}', space=sflag, size = 0x4, scoped, tag = 'scoped memory for tpu_custom_call.1']
    #allocation4 [shape = 's32[1]{0}', space=sflag, size = 0x4, scoped, tag = 'scoped memory for tpu_custom_call.1']
    #allocation5 [shape = 'u8[2048]{0}', space=vmem, size = 0x800, scoped, tag = 'output window, operand 0, single buffered']
    %6 = vsyncpa [#allocation3], 0
    %7 = vsyncpa [#allocation4], 0
    // Predicated region
    $region2: #{tpu_custom_call.1} parent=1 // pred_check
      _
    $region3: #{tpu_custom_call.1} parent=1 // pred_check_branch
      %9 = sbr.rel (0) target = $region5
    $region4: #{tpu_custom_call.1} parent=1 // pred_region
      %s11 = ssub.s32 64, 64
      %12 = vsyncadd [#allocation3], %s11
      %s14 = sshll.u32 [#allocation2], 4
      %s15 = int_to_ptr.vmem [resolvable:$true] %s14
      %17 = dma.hbm_to_vmem [thread:$0]  %s0, 64, %s15, [#allocation3]
    $region5: #{tpu_custom_call.1} parent=1 // pred_fallthru
      _
    // Predicated region
    $region6: #{tpu_custom_call.1} parent=1 // pred_check
      _
    $region7: #{tpu_custom_call.1} parent=1 // pred_check_branch
      %19 = sbr.rel (0) target = $region9
    $region8: #{tpu_custom_call.1} parent=1 // pred_region
      %20 = dma.done [#allocation3], 64
    $region9: #{tpu_custom_call.1} parent=1 // pred_fallthru
      _
    %v21 = vld [vmem:[#allocation2] sm:$0xf]
    %v22 = vlaneseq
    %vm23 = vcmp.ge.s32.totalorder %v22, 0
    %vm24 = vcmp.lt.s32.totalorder %v22, 512
    %vm25 = vmand %vm23, %vm24
    %26 = vst.msk [vmem:[#allocation5] sm:$0xf] %vm25, %v21
    // Predicated region
    $region10: #{tpu_custom_call.1} parent=1 // pred_check
      _
    $region11: #{tpu_custom_call.1} parent=1 // pred_check_branch
      %28 = sbr.rel (0) target = $region13
    $region12: #{tpu_custom_call.1} parent=1 // pred_region
      %s30 = ssub.s32 64, 64
      %31 = vsyncadd [#allocation4], %s30
      %s33 = sshll.u32 [#allocation5], 4
      %s34 = int_to_ptr.vmem [resolvable:$true] %s33
      %36 = dma.vmem_to_hbm [thread:$0]  %s34, 64, %s1, [#allocation4]
    $region13: #{tpu_custom_call.1} parent=1 // pred_fallthru
      _
    // Predicated region
    $region14: #{tpu_custom_call.1} parent=1 // pred_check
      _
    $region15: #{tpu_custom_call.1} parent=1 // pred_check_branch
      %38 = sbr.rel (0) target = $region17
    $region16: #{tpu_custom_call.1} parent=1 // pred_region
      %39 = dma.done [#allocation4], 64
    $region17: #{tpu_custom_call.1} parent=1 // pred_fallthru
      _
    %40 = vsyncpa [#allocation3], 1
    %41 = vsyncpa [#allocation4], 1

</llo_original>
